<compile_context>
chip_gen: v7x
topology: tpu7x:2x2x1
jax: 0.10.0
libtpu: 0.0.40
codegen_flags: <defaults>
</compile_context>

<pallas_src>
import jax
import jax.numpy as jnp
import numpy as np
from jax.experimental import pallas as pl
from jax.experimental.pallas import tpu as pltpu

OUT_PAD = 128        # lane-dense logit/output width (sliced to N+1 in wrapper)
NEG = -1e30          # softmax mask value for unused lanes


def _round_up(x, m):
    return ((x + m - 1) // m) * m


# ----------------------------------------------------------------------------
# Pallas implementation
# ----------------------------------------------------------------------------
def eiie_pallas(obs, last_action, params, *, batch_tile=512,
                input_dtype=jnp.float32):
    """EIIE forward.  obs: (B, F, N, T) NCHW float, last_action: (B, N+1).

    Returns (B, N+1) portfolio weights (softmax over [cash, stocks]).
    `batch_tile` is worth sweeping (512-2048) for large batches;
    `input_dtype=jnp.bfloat16` halves obs traffic (looser numerics).
    """
    B, F, N, T = obs.shape
    Np1 = last_action.shape[1]
    assert Np1 == N + 1, "last_action must have N+1 entries (cash + stocks)"
    assert N + 1 <= OUT_PAD, "too many stocks for the lane-dense output tile"
    Cm, ks = params["w1"].shape[0], params["w1"].shape[3]
    Cf = params["w2"].shape[0]
    ns = T - ks + 1                      # n_size = time_window - k_size + 1
    assert params["w2"].shape[3] == ns
    FNT = F * N * T
    NnsCm = N * ns * Cm
    NCf = N * Cf

    # ---- batch tiling ----
    B8 = _round_up(B, 8)
    TB = min(_round_up(batch_tile, 8), B8)
    if B8 // TB < 2 and B8 >= 16:
        # keep >= 2 grid steps so the "parallel" batch axis can be sharded
        # across both v7x TensorCores (no-op on single-TC v5e/v6e).
        TB = _round_up((B8 + 1) // 2, 8)
    B_pad = _round_up(B, TB)
    num_tiles = B_pad // TB

    # ---- inputs: no obs transpose, lanes follow the natural (f, n, t) order
    x = obs.astype(input_dtype).reshape(B, FNT)
    la = last_action[:, 1:].astype(jnp.float32)                    # (B, N)
    if B_pad != B:
        x = jnp.concatenate(
            [x, jnp.zeros((B_pad - B, FNT), x.dtype)], axis=0)
        la = jnp.concatenate(
            [la, jnp.zeros((B_pad - B, N), jnp.float32)], axis=0)

    # ---- weights: built once, column/row orders match the (f, n, t) lanes
    w1 = params["w1"].astype(jnp.float32)        # (Cm, F, 1, ks)
    w2 = params["w2"].astype(jnp.float32)        # (Cf, Cm, 1, ns)
    wf = params["wf"].astype(jnp.float32)        # (1, Cf+1, 1, 1)
    b1 = params["b1"].astype(jnp.float32)        # (Cm,)
    b2 = params["b2"].astype(jnp.float32)        # (Cf,)
    bf = params["bf"].astype(jnp.float32)        # (1,)
    eyeN = jnp.eye(N, dtype=jnp.float32)

    # conv1 -> per-stock Toeplitz K[f, t, j, c] = w1[c, f, 0, t - j]
    w1p = jnp.transpose(w1[:, :, 0, :], (1, 2, 0))                 # (F, ks, Cm)
    K = jnp.zeros((F, T, ns, Cm), jnp.float32)
    j_idx = jnp.arange(ns)
    for d in range(ks):
        K = K.at[:, j_idx + d, j_idx, :].set(w1p[:, d, :][:, None, :])
    # block-diagonal over stocks: rows (f, n', t) -> cols (n, j, c)
    w1_big = jnp.einsum("ftjc,pn->fptnjc", K, eyeN).reshape(FNT, NnsCm)
    w1_big = w1_big.astype(input_dtype)

    # conv2 (Cf, Cm, 1, ns) -> (ns*Cm, Cf), block-diagonal over stocks
    w2_flat = jnp.transpose(w2[:, :, 0, :], (2, 1, 0)).reshape(ns * Cm, Cf)
    w2_big = jnp.einsum("pn,rc->prnc", eyeN, w2_flat).reshape(NnsCm, NCf)

    # final 1x1 conv: stock-logit columns land directly in lanes 1..N
    wfc = wf[0, 1:, 0, 0]                                          # (Cf,)
    wf0 = wf[0, 0, 0, 0]                                           # scalar
    wf_cols = jnp.einsum("pn,c->pcn", eyeN, wfc).reshape(NCf, N)
    wf_bd = jnp.zeros((NCf, OUT_PAD), jnp.float32).at[:, 1:1 + N].set(wf_cols)
    la_proj = jnp.zeros((N, OUT_PAD), jnp.float32).at[:, 1:1 + N].set(wf0 * eyeN)

    # small additive params packed into one operand:
    #   row 0: conv1 bias tiled over (stock, tap)              (N*ns*Cm)
    #   row 1: conv2 bias tiled over stocks                    (N*Cf)
    #   row 2: logit add-vector [0 (cash), bf x N, NEG x rest] (OUT_PAD)
    L = max(NnsCm, NCf, OUT_PAD)
    misc = jnp.zeros((3, L), jnp.float32)
    misc = misc.at[0, :NnsCm].set(jnp.tile(b1, N * ns))
    misc = misc.at[1, :NCf].set(jnp.tile(b2, N))
    addv = jnp.full((OUT_PAD,), NEG, jnp.float32)
    addv = addv.at[0].set(0.0).at[1:1 + N].set(bf[0])
    misc = misc.at[2, :OUT_PAD].set(addv)

    def kernel(x_ref, la_ref, w1_ref, w2_ref, wf_ref, lap_ref, misc_ref,
               out_ref):
        # conv1 + ReLU: one block-diag Toeplitz matmul (all stocks, all taps)
        h = jnp.dot(x_ref[...], w1_ref[...],
                    preferred_element_type=jnp.float32)
        h = jnp.maximum(h + misc_ref[0:1, 0:NnsCm], 0.0)      # (TB, N*ns*Cm)
        # conv2 + ReLU: one block-diag matmul
        feat = jnp.dot(h, w2_ref[...], preferred_element_type=jnp.float32)
        feat = jnp.maximum(feat + misc_ref[1:2, 0:NCf], 0.0)  # (TB, N*Cf)
        # final 1x1 conv -> lane-dense logits (stock n at lane 1+n)
        logits = jnp.dot(feat, wf_ref[...],
                         preferred_element_type=jnp.float32)
        logits = logits + jnp.dot(la_ref[...], lap_ref[...],
                                  preferred_element_type=jnp.float32)
        logits = logits + misc_ref[2:3, 0:OUT_PAD]   # cash=0, +bf, mask pad
        # softmax over the full 128-lane tile (masked lanes underflow to 0)
        m = jnp.max(logits, axis=1, keepdims=True)
        e = jnp.exp(logits - m)
        s = jnp.sum(e, axis=1, keepdims=True)
        inv = pl.reciprocal(s, approx=True)
        inv = inv * (2.0 - s * inv)                  # one Newton step
        out_ref[...] = e * inv                       # single unmasked store

    out = pl.pallas_call(
        kernel,
        out_shape=jax.ShapeDtypeStruct((B_pad, OUT_PAD), jnp.float32),
        grid=(num_tiles,),
        in_specs=[
            pl.BlockSpec((TB, FNT), lambda i: (i, 0)),
            pl.BlockSpec((TB, N), lambda i: (i, 0)),
            pl.BlockSpec((FNT, NnsCm), lambda i: (0, 0)),
            pl.BlockSpec((NnsCm, NCf), lambda i: (0, 0)),
            pl.BlockSpec((NCf, OUT_PAD), lambda i: (0, 0)),
            pl.BlockSpec((N, OUT_PAD), lambda i: (0, 0)),
            pl.BlockSpec((3, L), lambda i: (0, 0)),
        ],
        out_specs=pl.BlockSpec((TB, OUT_PAD), lambda i: (i, 0)),
        compiler_params=pltpu.CompilerParams(
            dimension_semantics=("parallel",)),
    )(x, la, w1_big, w2_big, wf_bd, la_proj, misc)

    return out[:B, :Np1]


# ----------------------------------------------------------------------------
# Pure-JAX reference (mirrors the PyTorch EIIE module semantics exactly)
# ----------------------------------------------------------------------------
def _conv_1xk(x, w, b):
    # x: (B, Cin, N, L) NCHW, w: (Cout, Cin, 1, k), b: (Cout,)
    k = w.shape[3]
    Lo = x.shape[3] - k + 1
    windows = jnp.stack([x[:, :, :, d:d + Lo] for d in range(k)], axis=-1)
    out = jnp.einsum("binlk,oik->bonl", windows, w[:, :, 0, :],
                     precision=jax.lax.Precision.HIGHEST)
    return out + b[None, :, None, None]


def eiie_reference(obs, last_action, p):
    B, F, N, T = obs.shape
    h = jax.nn.relu(_conv_1xk(obs, p["w1"], p["b1"]))
    feat = jax.nn.relu(_conv_1xk(h, p["w2"], p["b2"]))          # (B, Cf, N, 1)
    last_stocks = last_action[:, 1:].reshape(B, 1, N, 1)
    cat = jnp.concatenate([last_stocks, feat], axis=1)          # (B, Cf+1, N, 1)
    out = jnp.einsum("bcnl,oc->bonl", cat, p["wf"][:, :, 0, 0],
                     precision=jax.lax.Precision.HIGHEST)
    out = out + p["bf"][None, :, None, None]                    # (B, 1, N, 1)
    cash = jnp.zeros((B, 1, 1, 1), out.dtype)
    out = jnp.concatenate([cash, out], axis=2)[:, 0, :, 0]      # (B, N+1)
    return jax.nn.softmax(out, axis=-1)


# ----------------------------------------------------------------------------
if __name__ == "__main__":
    # small shapes consistent with the module (time_window shrunk to 16)
    F, N, T = 3, 8, 16
    ks, Cm, Cf = 3, 2, 20
    Np1 = N + 1
    ns = T - ks + 1

    key = jax.random.PRNGKey(0)
    keys = jax.random.split(key, 12)

    def init(k, shape, scale=0.2):
        return scale * jax.random.normal(k, shape, dtype=jnp.float32)

    params = {
        "w1": init(keys[0], (Cm, F, 1, ks)),
        "b1": init(keys[1], (Cm,)),
        "w2": init(keys[2], (Cf, Cm, 1, ns)),
        "b2": init(keys[3], (Cf,)),
        "wf": init(keys[4], (1, Cf + 1, 1, 1)),
        "bf": init(keys[5], (1,)),
    }

    # case 1: tiny batch (single grid step, padded 2 -> 8), exact f32 path
    B = 2
    obs = jax.random.normal(keys[6], (B, F, N, T), dtype=jnp.float32)
    last_action = jax.nn.softmax(
        jax.random.normal(keys[7], (B, Np1), dtype=jnp.float32), axis=-1)
    out = jax.block_until_ready(eiie_pallas(obs, last_action, params))
    ref = eiie_reference(obs, last_action, params)
    np.testing.assert_allclose(np.asarray(out), np.asarray(ref),
                               atol=1e-4, rtol=1e-3)

    # case 2: multi-tile grid with ragged batch (B=10, TB=8 -> 2 grid steps)
    B = 10
    obs = jax.random.normal(keys[8], (B, F, N, T), dtype=jnp.float32)
    last_action = jax.nn.softmax(
        jax.random.normal(keys[9], (B, Np1), dtype=jnp.float32), axis=-1)
    out = jax.block_until_ready(
        eiie_pallas(obs, last_action, params, batch_tile=8))
    ref = eiie_reference(obs, last_action, params)
    np.testing.assert_allclose(np.asarray(out), np.asarray(ref),
                               atol=1e-4, rtol=1e-3)

    # case 3: bf16 obs / conv1-weight path (halved HBM traffic; looser check)
    B = 16
    obs = jax.random.normal(keys[10], (B, F, N, T), dtype=jnp.float32)
    last_action = jax.nn.softmax(
        jax.random.normal(keys[11], (B, Np1), dtype=jnp.float32), axis=-1)
    out = jax.block_until_ready(
        eiie_pallas(obs, last_action, params, input_dtype=jnp.bfloat16))
    ref = eiie_reference(obs, last_action, params)
    np.testing.assert_allclose(np.asarray(out), np.asarray(ref),
                               atol=5e-2, rtol=5e-2)

    print("KERNEL_OK")
</pallas_src>

<mosaic_0001>
module attributes {stable_mosaic.version = 11 : i64} {
  func.func @kernel(%arg0: i32, %arg1: memref<8x384xf32, #tpu.memory_space<vmem>>, %arg2: memref<8x8xf32, #tpu.memory_space<vmem>>, %arg3: memref<384x224xf32, #tpu.memory_space<vmem>>, %arg4: memref<224x160xf32, #tpu.memory_space<vmem>>, %arg5: memref<160x128xf32, #tpu.memory_space<vmem>>, %arg6: memref<8x128xf32, #tpu.memory_space<vmem>>, %arg7: memref<3x224xf32, #tpu.memory_space<vmem>>, %arg8: memref<8x128xf32, #tpu.memory_space<vmem>>) attributes {dimension_semantics = [#tpu.dimension_semantics<parallel>], iteration_bounds = array<i64: 1>, scalar_prefetch = 0 : i64, scratch_operands = 0 : i64, tpu.core_type = #tpu.core_type<tc>, window_params = [{transform_indices = @transform_0, window_bounds = array<i64: 8, 384>}, {transform_indices = @transform_1, window_bounds = array<i64: 8, 8>}, {pipeline_mode = #tpu.pipeline_mode<synchronous>, transform_indices = @transform_2, window_bounds = array<i64: 384, 224>}, {pipeline_mode = #tpu.pipeline_mode<synchronous>, transform_indices = @transform_3, window_bounds = array<i64: 224, 160>}, {pipeline_mode = #tpu.pipeline_mode<synchronous>, transform_indices = @transform_4, window_bounds = array<i64: 160, 128>}, {pipeline_mode = #tpu.pipeline_mode<synchronous>, transform_indices = @transform_5, window_bounds = array<i64: 8, 128>}, {pipeline_mode = #tpu.pipeline_mode<synchronous>, transform_indices = @transform_6, window_bounds = array<i64: 3, 224>}, {transform_indices = @transform_7, window_bounds = array<i64: 8, 128>}]} {
    %c0 = arith.constant 0 : index
    %c0_0 = arith.constant 0 : index
    %0 = vector.load %arg1[%c0, %c0_0] : memref<8x384xf32, #tpu.memory_space<vmem>>, vector<8x384xf32>
    %c0_1 = arith.constant 0 : index
    %c0_2 = arith.constant 0 : index
    %1 = vector.load %arg3[%c0_1, %c0_2] : memref<384x224xf32, #tpu.memory_space<vmem>>, vector<384x224xf32>
    %cst = arith.constant dense<0.000000e+00> : vector<8x224xf32>
    %2 = tpu.matmul %0, %1, %cst {dimension_numbers = #tpu.dot_dimension_numbers<[1], [0], [0], [1], [0, 0, 1, 1], [], []>} : vector<8x384xf32>, vector<384x224xf32>, vector<8x224xf32> -> vector<8x224xf32>
    %c0_3 = arith.constant 0 : index
    %c0_4 = arith.constant 0 : index
    %3 = vector.load %arg7[%c0_3, %c0_4] : memref<3x224xf32, #tpu.memory_space<vmem>>, vector<1x224xf32>
    %4 = vector.broadcast %3 : vector<1x224xf32> to vector<8x224xf32>
    %5 = arith.addf %2, %4 : vector<8x224xf32>
    %cst_5 = arith.constant 0.000000e+00 : f32
    %6 = vector.broadcast %cst_5 : f32 to vector<8x224xf32>
    %7 = arith.maximumf %5, %6 : vector<8x224xf32>
    %c0_6 = arith.constant 0 : index
    %c0_7 = arith.constant 0 : index
    %8 = vector.load %arg4[%c0_6, %c0_7] : memref<224x160xf32, #tpu.memory_space<vmem>>, vector<224x160xf32>
    %cst_8 = arith.constant dense<0.000000e+00> : vector<8x160xf32>
    %9 = tpu.matmul %7, %8, %cst_8 {dimension_numbers = #tpu.dot_dimension_numbers<[1], [0], [0], [1], [0, 0, 1, 1], [], []>} : vector<8x224xf32>, vector<224x160xf32>, vector<8x160xf32> -> vector<8x160xf32>
    %c1 = arith.constant 1 : index
    %c0_9 = arith.constant 0 : index
    %10 = vector.load %arg7[%c1, %c0_9] : memref<3x224xf32, #tpu.memory_space<vmem>>, vector<1x160xf32>
    %11 = vector.broadcast %10 : vector<1x160xf32> to vector<8x160xf32>
    %12 = arith.addf %9, %11 : vector<8x160xf32>
    %cst_10 = arith.constant 0.000000e+00 : f32
    %13 = vector.broadcast %cst_10 : f32 to vector<8x160xf32>
    %14 = arith.maximumf %12, %13 : vector<8x160xf32>
    %c0_11 = arith.constant 0 : index
    %c0_12 = arith.constant 0 : index
    %15 = vector.load %arg5[%c0_11, %c0_12] : memref<160x128xf32, #tpu.memory_space<vmem>>, vector<160x128xf32>
    %cst_13 = arith.constant dense<0.000000e+00> : vector<8x128xf32>
    %16 = tpu.matmul %14, %15, %cst_13 {dimension_numbers = #tpu.dot_dimension_numbers<[1], [0], [0], [1], [0, 0, 1, 1], [], []>} : vector<8x160xf32>, vector<160x128xf32>, vector<8x128xf32> -> vector<8x128xf32>
    %c0_14 = arith.constant 0 : index
    %c0_15 = arith.constant 0 : index
    %17 = vector.load %arg2[%c0_14, %c0_15] : memref<8x8xf32, #tpu.memory_space<vmem>>, vector<8x8xf32>
    %c0_16 = arith.constant 0 : index
    %c0_17 = arith.constant 0 : index
    %18 = vector.load %arg6[%c0_16, %c0_17] : memref<8x128xf32, #tpu.memory_space<vmem>>, vector<8x128xf32>
    %cst_18 = arith.constant dense<0.000000e+00> : vector<8x128xf32>
    %19 = tpu.matmul %17, %18, %cst_18 {dimension_numbers = #tpu.dot_dimension_numbers<[1], [0], [0], [1], [0, 0, 1, 1], [], []>} : vector<8x8xf32>, vector<8x128xf32>, vector<8x128xf32> -> vector<8x128xf32>
    %20 = arith.addf %16, %19 : vector<8x128xf32>
    %c2 = arith.constant 2 : index
    %c0_19 = arith.constant 0 : index
    %21 = vector.load %arg7[%c2, %c0_19] : memref<3x224xf32, #tpu.memory_space<vmem>>, vector<1x128xf32>
    %22 = vector.broadcast %21 : vector<1x128xf32> to vector<8x128xf32>
    %23 = arith.addf %20, %22 : vector<8x128xf32>
    %cst_20 = arith.constant dense<0xFF800000> : vector<8xf32>
    %24 = vector.multi_reduction <maximumf>, %23, %cst_20 [1] : vector<8x128xf32> to vector<8xf32>
    %25 = vector.shape_cast %24 : vector<8xf32> to vector<8x1xf32>
    %26 = vector.broadcast %25 : vector<8x1xf32> to vector<8x128xf32>
    %27 = arith.subf %23, %26 : vector<8x128xf32>
    %28 = math.exp %27 : vector<8x128xf32>
    %cst_21 = arith.constant dense<0.000000e+00> : vector<8xf32>
    %29 = vector.multi_reduction <add>, %28, %cst_21 [1] : vector<8x128xf32> to vector<8xf32>
    %30 = vector.shape_cast %29 : vector<8xf32> to vector<8x1xf32>
    %31 = tpu.reciprocal %30 {approx = true} : vector<8x1xf32> -> vector<8x1xf32>
    %32 = arith.mulf %30, %31 : vector<8x1xf32>
    %cst_22 = arith.constant 2.000000e+00 : f32
    %33 = vector.broadcast %cst_22 : f32 to vector<8x1xf32>
    %34 = arith.subf %33, %32 : vector<8x1xf32>
    %35 = arith.mulf %31, %34 : vector<8x1xf32>
    %36 = vector.broadcast %35 : vector<8x1xf32> to vector<8x128xf32>
    %37 = arith.mulf %28, %36 : vector<8x128xf32>
    %c0_23 = arith.constant 0 : index
    %c0_24 = arith.constant 0 : index
    %38 = vector.load %arg8[%c0_23, %c0_24] : memref<8x128xf32, #tpu.memory_space<vmem>>, vector<8x128xf32>
    tpu.vector_store %arg8[%c0_23, %c0_24], %37 {strides = array<i32>} : memref<8x128xf32, #tpu.memory_space<vmem>>, vector<8x128xf32>,
    return
  }
  func.func @transform_0(%arg0: i32) -> (i32, i32) {
    %c0_i32 = arith.constant 0 : i32
    %c0_i32_0 = arith.constant 0 : i32
    return %arg0, %c0_i32 : i32, i32
  }
  func.func @transform_1(%arg0: i32) -> (i32, i32) {
    %c0_i32 = arith.constant 0 : i32
    %c0_i32_0 = arith.constant 0 : i32
    return %arg0, %c0_i32 : i32, i32
  }
  func.func @transform_2(%arg0: i32) -> (i32, i32) {
    %c0_i32 = arith.constant 0 : i32
    %c0_i32_0 = arith.constant 0 : i32
    %c0_i32_1 = arith.constant 0 : i32
    return %c0_i32, %c0_i32_0 : i32, i32
  }
  func.func @transform_3(%arg0: i32) -> (i32, i32) {
    %c0_i32 = arith.constant 0 : i32
    %c0_i32_0 = arith.constant 0 : i32
    %c0_i32_1 = arith.constant 0 : i32
    return %c0_i32, %c0_i32_0 : i32, i32
  }
  func.func @transform_4(%arg0: i32) -> (i32, i32) {
    %c0_i32 = arith.constant 0 : i32
    %c0_i32_0 = arith.constant 0 : i32
    %c0_i32_1 = arith.constant 0 : i32
    return %c0_i32, %c0_i32_0 : i32, i32
  }
  func.func @transform_5(%arg0: i32) -> (i32, i32) {
    %c0_i32 = arith.constant 0 : i32
    %c0_i32_0 = arith.constant 0 : i32
    %c0_i32_1 = arith.constant 0 : i32
    return %c0_i32, %c0_i32_0 : i32, i32
  }
  func.func @transform_6(%arg0: i32) -> (i32, i32) {
    %c0_i32 = arith.constant 0 : i32
    %c0_i32_0 = arith.constant 0 : i32
    %c0_i32_1 = arith.constant 0 : i32
    return %c0_i32, %c0_i32_0 : i32, i32
  }
  func.func @transform_7(%arg0: i32) -> (i32, i32) {
    %c0_i32 = arith.constant 0 : i32
    %c0_i32_0 = arith.constant 0 : i32
    return %arg0, %c0_i32 : i32, i32
  }
}

</mosaic_0001>

<llo_original>
// kernel: tpu_custom_call.1
$region0: #{tpu_custom_call.1}
  #allocation0 [shape = 'u32[]', space=smem, size = 0x4, offset = 0x4, fixed_abs, tag = 'smem constant byte address 0x4 - core index']
  #allocation1 [shape = 'u32[144,128]{1,0:T(1,128)}', space=vmem, size = 0x12000, scoped, tag = 'internal scratch']
  %s0 = inlined_call_operand.vmem [shape: f32[8,384], index: 0, kind: input, shape index: {}]
  %s1 = inlined_call_operand.vmem [shape: f32[8,8], index: 1, kind: input, shape index: {}]
  %s2 = inlined_call_operand.vmem [shape: f32[384,224], index: 2, kind: input, shape index: {}]
  %s3 = inlined_call_operand.vmem [shape: f32[224,160], index: 3, kind: input, shape index: {}]
  %s4 = inlined_call_operand.vmem [shape: f32[160,128], index: 4, kind: input, shape index: {}]
  %s5 = inlined_call_operand.vmem [shape: f32[8,128], index: 5, kind: input, shape index: {}]
  %s6 = inlined_call_operand.vmem [shape: f32[3,224], index: 6, kind: input, shape index: {}]
  %s7 = inlined_call_operand.hbm [shape: f32[8,128], index: 7, kind: output, shape index: {}]
  %s8 = sld [smem:[#allocation0]]
  $region38: #{tpu_custom_call.1} parent=0
    _
  %s10 = ssub.s32 1, %s8
  %s11 = scalar_select 0, %s10, %s8
  $region1: #{tpu_custom_call.1} parent=0
    #allocation2 [shape = 'u8[4096]{0}', space=vmem, size = 0x1000, scoped, tag = 'output window, operand 0, single buffered']
    #allocation3 [shape = 's32[1]{0}', space=sflag, size = 0x4, scoped, tag = 'scoped memory for tpu_custom_call.1']
    %12 = vsyncpa [#allocation3], 0
    // Predicated region
    $region2: #{tpu_custom_call.1} parent=1 // pred_check
      _
    $region3: #{tpu_custom_call.1} parent=1 // pred_check_branch
      %14 = sbr.rel (0) target = $region5
    $region4: #{tpu_custom_call.1} parent=1 // pred_region
      _
    $region5: #{tpu_custom_call.1} parent=1 // pred_fallthru
      _
    // Predicated region
    $region6: #{tpu_custom_call.1} parent=1 // pred_check
      _
    $region7: #{tpu_custom_call.1} parent=1 // pred_check_branch
      %16 = sbr.rel (0) target = $region9
    $region8: #{tpu_custom_call.1} parent=1 // pred_region
      _
    $region9: #{tpu_custom_call.1} parent=1 // pred_fallthru
      _
    // Predicated region
    $region10: #{tpu_custom_call.1} parent=1 // pred_check
      _
    $region11: #{tpu_custom_call.1} parent=1 // pred_check_branch
      %18 = sbr.rel (0) target = $region13
    $region12: #{tpu_custom_call.1} parent=1 // pred_region
      _
    $region13: #{tpu_custom_call.1} parent=1 // pred_fallthru
      _
    // Predicated region
    $region14: #{tpu_custom_call.1} parent=1 // pred_check
      _
    $region15: #{tpu_custom_call.1} parent=1 // pred_check_branch
      %20 = sbr.rel (0) target = $region17
    $region16: #{tpu_custom_call.1} parent=1 // pred_region
      _
    $region17: #{tpu_custom_call.1} parent=1 // pred_fallthru
      _
    // Predicated region
    $region18: #{tpu_custom_call.1} parent=1 // pred_check
      _
    $region19: #{tpu_custom_call.1} parent=1 // pred_check_branch
      %22 = sbr.rel (0) target = $region21
    $region20: #{tpu_custom_call.1} parent=1 // pred_region
      _
    $region21: #{tpu_custom_call.1} parent=1 // pred_fallthru
      _
    // Predicated region
    $region22: #{tpu_custom_call.1} parent=1 // pred_check
      _
    $region23: #{tpu_custom_call.1} parent=1 // pred_check_branch
      %24 = sbr.rel (0) target = $region25
    $region24: #{tpu_custom_call.1} parent=1 // pred_region
      _
    $region25: #{tpu_custom_call.1} parent=1 // pred_fallthru
      _
    // Predicated region
    $region26: #{tpu_custom_call.1} parent=1 // pred_check
      _
    $region27: #{tpu_custom_call.1} parent=1 // pred_check_branch
      %26 = sbr.rel (0) target = $region29
    $region28: #{tpu_custom_call.1} parent=1 // pred_region
      _
    $region29: #{tpu_custom_call.1} parent=1 // pred_fallthru
      _
    %v27 = vld [vmem:[%s0] sm:$0xff]
    %v28 = vld [vmem:[%s0 + $0x8] sm:$0xff]
    %v29 = vld [vmem:[%s0 + $0x10] sm:$0xff]
    %v30 = vld [vmem:[%s2] sm:$0xff]
    %v31 = vld [vmem:[%s2 + $0x8] sm:$0xff]
    %v32 = vld [vmem:[%s2 + $0x10] sm:$0xff]
    %v33 = vld [vmem:[%s2 + $0x18] sm:$0xff]
    %v34 = vld [vmem:[%s2 + $0x20] sm:$0xff]
    %v35 = vld [vmem:[%s2 + $0x28] sm:$0xff]
    %v36 = vld [vmem:[%s2 + $0x30] sm:$0xff]
    %v37 = vld [vmem:[%s2 + $0x38] sm:$0xff]
    %v38 = vld [vmem:[%s2 + $0x40] sm:$0xff]
    %v39 = vld [vmem:[%s2 + $0x48] sm:$0xff]
    %v40 = vld [vmem:[%s2 + $0x50] sm:$0xff]
    %v41 = vld [vmem:[%s2 + $0x58] sm:$0xff]
    %v42 = vld [vmem:[%s2 + $0x60] sm:$0xff]
    %v43 = vld [vmem:[%s2 + $0x68] sm:$0xff]
    %v44 = vld [vmem:[%s2 + $0x70] sm:$0xff]
    %v45 = vld [vmem:[%s2 + $0x78] sm:$0xff]
    %v46 = vld [vmem:[%s2 + $0x80] sm:$0xff]
    %v47 = vld [vmem:[%s2 + $0x88] sm:$0xff]
    %v48 = vld [vmem:[%s2 + $0x90] sm:$0xff]
    %v49 = vld [vmem:[%s2 + $0x98] sm:$0xff]
    %v50 = vld [vmem:[%s2 + $0xa0] sm:$0xff]
    %v51 = vld [vmem:[%s2 + $0xa8] sm:$0xff]
    %v52 = vld [vmem:[%s2 + $0xb0] sm:$0xff]
    %v53 = vld [vmem:[%s2 + $0xb8] sm:$0xff]
    %v54 = vld [vmem:[%s2 + $0xc0] sm:$0xff]
    %v55 = vld [vmem:[%s2 + $0xc8] sm:$0xff]
    %v56 = vld [vmem:[%s2 + $0xd0] sm:$0xff]
    %v57 = vld [vmem:[%s2 + $0xd8] sm:$0xff]
    %v58 = vld [vmem:[%s2 + $0xe0] sm:$0xff]
    %v59 = vld [vmem:[%s2 + $0xe8] sm:$0xff]
    %v60 = vld [vmem:[%s2 + $0xf0] sm:$0xff]
    %v61 = vld [vmem:[%s2 + $0xf8] sm:$0xff]
    %v62 = vld [vmem:[%s2 + $0x100] sm:$0xff]
    %v63 = vld [vmem:[%s2 + $0x108] sm:$0xff]
    %v64 = vld [vmem:[%s2 + $0x110] sm:$0xff]
    %v65 = vld [vmem:[%s2 + $0x118] sm:$0xff]
    %v66 = vld [vmem:[%s2 + $0x120] sm:$0xff]
    %v67 = vld [vmem:[%s2 + $0x128] sm:$0xff]
    %v68 = vld [vmem:[%s2 + $0x130] sm:$0xff]
    %v69 = vld [vmem:[%s2 + $0x138] sm:$0xff]
    %v70 = vld [vmem:[%s2 + $0x140] sm:$0xff]
    %v71 = vld [vmem:[%s2 + $0x148] sm:$0xff]
    %v72 = vld [vmem:[%s2 + $0x150] sm:$0xff]
    %v73 = vld [vmem:[%s2 + $0x158] sm:$0xff]
    %v74 = vld [vmem:[%s2 + $0x160] sm:$0xff]
    %v75 = vld [vmem:[%s2 + $0x168] sm:$0xff]
    %v76 = vld [vmem:[%s2 + $0x170] sm:$0xff]
    %v77 = vld [vmem:[%s2 + $0x178] sm:$0xff]
    %v78 = vld [vmem:[%s2 + $0x180] sm:$0xff]
    %v79 = vld [vmem:[%s2 + $0x188] sm:$0xff]
    %v80 = vld [vmem:[%s2 + $0x190] sm:$0xff]
    %v81 = vld [vmem:[%s2 + $0x198] sm:$0xff]
    %v82 = vld [vmem:[%s2 + $0x1a0] sm:$0xff]
    %v83 = vld [vmem:[%s2 + $0x1a8] sm:$0xff]
    %v84 = vld [vmem:[%s2 + $0x1b0] sm:$0xff]
    %v85 = vld [vmem:[%s2 + $0x1b8] sm:$0xff]
    %v86 = vld [vmem:[%s2 + $0x1c0] sm:$0xff]
    %v87 = vld [vmem:[%s2 + $0x1c8] sm:$0xff]
    %v88 = vld [vmem:[%s2 + $0x1d0] sm:$0xff]
    %v89 = vld [vmem:[%s2 + $0x1d8] sm:$0xff]
    %v90 = vld [vmem:[%s2 + $0x1e0] sm:$0xff]
    %v91 = vld [vmem:[%s2 + $0x1e8] sm:$0xff]
    %v92 = vld [vmem:[%s2 + $0x1f0] sm:$0xff]
    %v93 = vld [vmem:[%s2 + $0x1f8] sm:$0xff]
    %v94 = vld [vmem:[%s2 + $0x200] sm:$0xff]
    %v95 = vld [vmem:[%s2 + $0x208] sm:$0xff]
    %v96 = vld [vmem:[%s2 + $0x210] sm:$0xff]
    %v97 = vld [vmem:[%s2 + $0x218] sm:$0xff]
    %v98 = vld [vmem:[%s2 + $0x220] sm:$0xff]
    %v99 = vld [vmem:[%s2 + $0x228] sm:$0xff]
    %v100 = vld [vmem:[%s2 + $0x230] sm:$0xff]
    %v101 = vld [vmem:[%s2 + $0x238] sm:$0xff]
    %v102 = vld [vmem:[%s2 + $0x240] sm:$0xff]
    %v103 = vld [vmem:[%s2 + $0x248] sm:$0xff]
    %v104 = vld [vmem:[%s2 + $0x250] sm:$0xff]
    %v105 = vld [vmem:[%s2 + $0x258] sm:$0xff]
    %v106 = vld [vmem:[%s2 + $0x260] sm:$0xff]
    %v107 = vld [vmem:[%s2 + $0x268] sm:$0xff]
    %v108 = vld [vmem:[%s2 + $0x270] sm:$0xff]
    %v109 = vld [vmem:[%s2 + $0x278] sm:$0xff]
    %v110 = vld [vmem:[%s2 + $0x280] sm:$0xff]
    %v111 = vld [vmem:[%s2 + $0x288] sm:$0xff]
    %v112 = vld [vmem:[%s2 + $0x290] sm:$0xff]
    %v113 = vld [vmem:[%s2 + $0x298] sm:$0xff]
    %v114 = vld [vmem:[%s2 + $0x2a0] sm:$0xff]
    %v115 = vld [vmem:[%s2 + $0x2a8] sm:$0xff]
    %v116 = vld [vmem:[%s2 + $0x2b0] sm:$0xff]
    %v117 = vld [vmem:[%s2 + $0x2b8] sm:$0xff]
    %v118 = vld [vmem:[%s2 + $0x2c0] sm:$0xff]
    %v119 = vld [vmem:[%s2 + $0x2c8] sm:$0xff]
    %v120 = vld [vmem:[%s2 + $0x2d0] sm:$0xff]
    %v121 = vld [vmem:[%s2 + $0x2d8] sm:$0xff]
    %v122 = vld [vmem:[%s2 + $0x2e0] sm:$0xff]
    %v123 = vld [vmem:[%s2 + $0x2e8] sm:$0xff]
    %v124 = vld [vmem:[%s2 + $0x2f0] sm:$0xff]
    %v125 = vld [vmem:[%s2 + $0x2f8] sm:$0xff]
    %v126 = vld [vmem:[%s6] ss:$4 sm:$0x3]
    %v128 = vlaneseq
    %v129 = vshrl.u32 %v128, 7
    %v130 = vsub.s32 0, %v129
    %v131 = vrot.slane %v126, %v130
    %v132 = vlaneseq
    %v133 = vshrl.u32 %v132, 7
    %v134 = vsub.s32 1, %v133
    %v135 = vrot.slane %v126, %v134
    %138 = vmatprep.subr.mxu0 %v31
    %139 = vmatpush1.msra.mxu0 %v30
    %140 = vmatprep.subr.mxu0 %v33
    %141 = vmatpush1.msra.mxu0 %v32
    %142 = vmatprep.subr.mxu0 %v35
    %143 = vmatpush1.msra.mxu0 %v34
    %144 = vmatprep.subr.mxu0 %v37
    %145 = vmatpush1.msra.mxu0 %v36
    %146 = vmatprep.subr.mxu0 %v39
    %147 = vmatpush1.msra.mxu0 %v38
    %148 = vmatprep.subr.mxu0 %v41
    %149 = vmatpush1.msra.mxu0 %v40
    %150 = vmatprep.subr.mxu0 %v43
    %151 = vmatpush1.msra.mxu0 %v42
    %152 = vmatprep.subr.mxu0 %v45
    %153 = vmatpush1.msra.mxu0 %v44
    %154 = vmatprep.subr.mxu0 %v47
    %155 = vmatpush1.msra.mxu0 %v46
    %156 = vmatprep.subr.mxu0 %v49
    %157 = vmatpush1.msra.mxu0 %v48
    %158 = vmatprep.subr.mxu0 %v51
    %159 = vmatpush1.msra.mxu0 %v50
    %160 = vmatprep.subr.mxu0 %v53
    %161 = vmatpush1.msra.mxu0 %v52
    %162 = vmatprep.subr.mxu0 %v55
    %163 = vmatpush1.msra.mxu0 %v54
    %164 = vmatprep.subr.mxu0 %v57
    %165 = vmatpush1.msra.mxu0 %v56
    %166 = vmatprep.subr.mxu0 %v59
    %167 = vmatpush1.msra.mxu0 %v58
    %168 = vmatprep.subr.mxu0 %v61
    %169 = vmatpush1.msra.mxu0 %v60
    %170 = vmatprep.subr.mxu0 %v63
    %171 = vmatpush1.msra.mxu0 %v62
    %172 = vmatprep.subr.mxu0 %v65
    %173 = vmatpush1.msra.mxu0 %v64
    %174 = vmatprep.subr.mxu0 %v67
    %175 = vmatpush1.msra.mxu0 %v66
    %176 = vmatprep.subr.mxu0 %v69
    %177 = vmatpush1.msra.mxu0 %v68
    %178 = vmatprep.subr.mxu0 %v71
    %179 = vmatpush1.msra.mxu0 %v70
    %180 = vmatprep.subr.mxu0 %v73
    %181 = vmatpush1.msra.mxu0 %v72
    %182 = vmatprep.subr.mxu0 %v75
    %183 = vmatpush1.msra.mxu0 %v74
    %184 = vmatprep.subr.mxu0 %v77
    %185 = vmatpush1.msra.mxu0 %v76
    %186 = vmatprep.subr.mxu0 %v79
    %187 = vmatpush1.msra.mxu0 %v78
    %188 = vmatprep.subr.mxu0 %v81
    %189 = vmatpush1.msra.mxu0 %v80
    %190 = vmatprep.subr.mxu0 %v83
    %191 = vmatpush1.msra.mxu0 %v82
    %192 = vmatprep.subr.mxu0 %v85
    %193 = vmatpush1.msra.mxu0 %v84
    %194 = vmatprep.subr.mxu0 %v87
    %195 = vmatpush1.msra.mxu0 %v86
    %196 = vmatprep.subr.mxu0 %v89
    %197 = vmatpush1.msra.mxu0 %v88
    %198 = vmatprep.subr.mxu0 %v91
    %199 = vmatpush1.msra.mxu0 %v90
    %200 = vmatprep.subr.mxu0 %v93
    %201 = vmatpush1.msra.mxu0 %v92
    %202 = vmatprep.mubr.f32.mxu0 %v28
    %203 = vmatmul.mubr.f32.gmra.mrb[0].mxu0 %v27
    %v204 = vpop.f32.mrb[0].mxu0
    %v205 = vadd.f32 %v131, %v204
    %v206 = vpop.f32.mrb[0].mxu0
    %v207 = vadd.f32 %v135, %v206
    %208 = vdwg.mxu0
    %209 = vmatprep.subr.mxu0 %v95
    %210 = vmatpush1.msra.mxu0 %v94
    %211 = vmatprep.subr.mxu0 %v97
    %212 = vmatpush1.msra.mxu0 %v96
    %213 = vmatprep.subr.mxu0 %v99
    %214 = vmatpush1.msra.mxu0 %v98
    %215 = vmatprep.subr.mxu0 %v101
    %216 = vmatpush1.msra.mxu0 %v100
    %217 = vmatprep.subr.mxu0 %v103
    %218 = vmatpush1.msra.mxu0 %v102
    %219 = vmatprep.subr.mxu0 %v105
    %220 = vmatpush1.msra.mxu0 %v104
    %221 = vmatprep.subr.mxu0 %v107
    %222 = vmatpush1.msra.mxu0 %v106
    %223 = vmatprep.subr.mxu0 %v109
    %224 = vmatpush1.msra.mxu0 %v108
    %225 = vmatprep.subr.mxu0 %v111
    %226 = vmatpush1.msra.mxu0 %v110
    %227 = vmatprep.subr.mxu0 %v113
    %228 = vmatpush1.msra.mxu0 %v112
    %229 = vmatprep.subr.mxu0 %v115
    %230 = vmatpush1.msra.mxu0 %v114
    %231 = vmatprep.subr.mxu0 %v117
    %232 = vmatpush1.msra.mxu0 %v116
    %233 = vmatprep.subr.mxu0 %v119
    %234 = vmatpush1.msra.mxu0 %v118
    %235 = vmatprep.subr.mxu0 %v121
    %236 = vmatpush1.msra.mxu0 %v120
    %237 = vmatprep.subr.mxu0 %v123
    %238 = vmatpush1.msra.mxu0 %v122
    %239 = vmatprep.subr.mxu0 %v125
    %240 = vmatpush1.msra.mxu0 %v124
    %241 = vmatprep.subr.mxu0 0.0
    %242 = vmatpush1.msra.mxu0 0.0
    %243 = vmatprep.subr.mxu0 0.0
    %244 = vmatpush1.msra.mxu0 0.0
    %245 = vmatprep.subr.mxu0 0.0
    %246 = vmatpush1.msra.mxu0 0.0
    %247 = vmatprep.subr.mxu0 0.0
    %248 = vmatpush1.msra.mxu0 0.0
    %249 = vmatprep.subr.mxu0 0.0
    %250 = vmatpush1.msra.mxu0 0.0
    %251 = vmatprep.subr.mxu0 0.0
    %252 = vmatpush1.msra.mxu0 0.0
    %253 = vmatprep.subr.mxu0 0.0
    %254 = vmatpush1.msra.mxu0 0.0
    %255 = vmatprep.subr.mxu0 0.0
    %256 = vmatpush1.msra.mxu0 0.0
    %257 = vmatprep.subr.mxu0 0.0
    %258 = vmatpush1.msra.mxu0 0.0
    %259 = vmatprep.subr.mxu0 0.0
    %260 = vmatpush1.msra.mxu0 0.0
    %261 = vmatprep.subr.mxu0 0.0
    %262 = vmatpush1.msra.mxu0 0.0
    %263 = vmatprep.subr.mxu0 0.0
    %264 = vmatpush1.msra.mxu0 0.0
    %265 = vmatprep.subr.mxu0 0.0
    %266 = vmatpush1.msra.mxu0 0.0
    %267 = vmatprep.subr.mxu0 0.0
    %268 = vmatpush1.msra.mxu0 0.0
    %269 = vmatprep.subr.mxu0 0.0
    %270 = vmatpush1.msra.mxu0 0.0
    %271 = vmatprep.subr.mxu0 0.0
    %272 = vmatpush1.msra.mxu0 0.0
    %273 = vmatprep.mubr.f32.mxu0 0.0
    %274 = vmatmul.mubr.f32.gmra.mrb[0].mxu0 %v29
    %v275 = vpop.f32.mrb[0].mxu0
    %v276 = vadd.f32 %v205, %v275
    %v277 = vpop.f32.mrb[0].mxu0
    %v278 = vadd.f32 %v207, %v277
    %279 = vdwg.mxu0
    %v280 = vmax.f32 %v276, 0.0
    %v281 = vmax.f32 %v278, 0.0
    %v282 = vld [vmem:[%s3] sm:$0xff]
    %v283 = vld [vmem:[%s3 + $0x8] sm:$0xff]
    %v284 = vld [vmem:[%s3 + $0x10] sm:$0xff]
    %v285 = vld [vmem:[%s3 + $0x18] sm:$0xff]
    %v286 = vld [vmem:[%s3 + $0x20] sm:$0xff]
    %v287 = vld [vmem:[%s3 + $0x28] sm:$0xff]
    %v288 = vld [vmem:[%s3 + $0x30] sm:$0xff]
    %v289 = vld [vmem:[%s3 + $0x38] sm:$0xff]
    %v290 = vld [vmem:[%s3 + $0x40] sm:$0xff]
    %v291 = vld [vmem:[%s3 + $0x48] sm:$0xff]
    %v292 = vld [vmem:[%s3 + $0x50] sm:$0xff]
    %v293 = vld [vmem:[%s3 + $0x58] sm:$0xff]
    %v294 = vld [vmem:[%s3 + $0x60] sm:$0xff]
    %v295 = vld [vmem:[%s3 + $0x68] sm:$0xff]
    %v296 = vld [vmem:[%s3 + $0x70] sm:$0xff]
    %v297 = vld [vmem:[%s3 + $0x78] sm:$0xff]
    %v298 = vld [vmem:[%s3 + $0x80] sm:$0xff]
    %v299 = vld [vmem:[%s3 + $0x88] sm:$0xff]
    %v300 = vld [vmem:[%s3 + $0x90] sm:$0xff]
    %v301 = vld [vmem:[%s3 + $0x98] sm:$0xff]
    %v302 = vld [vmem:[%s3 + $0xa0] sm:$0xff]
    %v303 = vld [vmem:[%s3 + $0xa8] sm:$0xff]
    %v304 = vld [vmem:[%s3 + $0xb0] sm:$0xff]
    %v305 = vld [vmem:[%s3 + $0xb8] sm:$0xff]
    %v306 = vld [vmem:[%s3 + $0xc0] sm:$0xff]
    %v307 = vld [vmem:[%s3 + $0xc8] sm:$0xff]
    %v308 = vld [vmem:[%s3 + $0xd0] sm:$0xff]
    %v309 = vld [vmem:[%s3 + $0xd8] sm:$0xff]
    %v310 = vld [vmem:[%s3 + $0xe0] sm:$0xff]
    %v311 = vld [vmem:[%s3 + $0xe8] sm:$0xff]
    %v312 = vld [vmem:[%s3 + $0xf0] sm:$0xff]
    %v313 = vld [vmem:[%s3 + $0xf8] sm:$0xff]
    %v314 = vld [vmem:[%s3 + $0x100] sm:$0xff]
    %v315 = vld [vmem:[%s3 + $0x108] sm:$0xff]
    %v316 = vld [vmem:[%s3 + $0x110] sm:$0xff]
    %v317 = vld [vmem:[%s3 + $0x118] sm:$0xff]
    %v318 = vld [vmem:[%s3 + $0x120] sm:$0xff]
    %v319 = vld [vmem:[%s3 + $0x128] sm:$0xff]
    %v320 = vld [vmem:[%s3 + $0x130] sm:$0xff]
    %v321 = vld [vmem:[%s3 + $0x138] sm:$0xff]
    %v322 = vld [vmem:[%s3 + $0x140] sm:$0xff]
    %v323 = vld [vmem:[%s3 + $0x148] sm:$0xff]
    %v324 = vld [vmem:[%s3 + $0x150] sm:$0xff]
    %v325 = vld [vmem:[%s3 + $0x158] sm:$0xff]
    %v326 = vld [vmem:[%s3 + $0x160] sm:$0xff]
    %v327 = vld [vmem:[%s3 + $0x168] sm:$0xff]
    %v328 = vld [vmem:[%s3 + $0x170] sm:$0xff]
    %v329 = vld [vmem:[%s3 + $0x178] sm:$0xff]
    %v330 = vld [vmem:[%s3 + $0x180] sm:$0xff]
    %v331 = vld [vmem:[%s3 + $0x188] sm:$0xff]
    %v332 = vld [vmem:[%s3 + $0x190] sm:$0xff]
    %v333 = vld [vmem:[%s3 + $0x198] sm:$0xff]
    %v334 = vld [vmem:[%s3 + $0x1a0] sm:$0xff]
    %v335 = vld [vmem:[%s3 + $0x1a8] sm:$0xff]
    %v336 = vld [vmem:[%s3 + $0x1b0] sm:$0xff]
    %v337 = vld [vmem:[%s3 + $0x1b8] sm:$0xff]
    %s338 = scalar_lea.vmem %s6, 1
    %v339 = vld [vmem:[%s338] ss:$4 sm:$0x3]
    %v341 = vlaneseq
    %v342 = vshrl.u32 %v341, 7
    %v343 = vsub.s32 0, %v342
    %v344 = vrot.slane %v339, %v343
    %v345 = vlaneseq
    %v346 = vshrl.u32 %v345, 7
    %v347 = vsub.s32 1, %v346
    %v348 = vrot.slane %v339, %v347
    %vm351 = vcmask 785408
    %v353 = vsel %vm351, %v281, 0
    %355 = vmatprep.subr.mxu0 %v283
    %356 = vmatpush1.msra.mxu0 %v282
    %357 = vmatprep.subr.mxu0 %v285
    %358 = vmatpush1.msra.mxu0 %v284
    %359 = vmatprep.subr.mxu0 %v287
    %360 = vmatpush1.msra.mxu0 %v286
    %361 = vmatprep.subr.mxu0 %v289
    %362 = vmatpush1.msra.mxu0 %v288
    %363 = vmatprep.subr.mxu0 %v291
    %364 = vmatpush1.msra.mxu0 %v290
    %365 = vmatprep.subr.mxu0 %v293
    %366 = vmatpush1.msra.mxu0 %v292
    %367 = vmatprep.subr.mxu0 %v295
    %368 = vmatpush1.msra.mxu0 %v294
    %369 = vmatprep.subr.mxu0 %v297
    %370 = vmatpush1.msra.mxu0 %v296
    %371 = vmatprep.subr.mxu0 %v299
    %372 = vmatpush1.msra.mxu0 %v298
    %373 = vmatprep.subr.mxu0 %v301
    %374 = vmatpush1.msra.mxu0 %v300
    %375 = vmatprep.subr.mxu0 %v303
    %376 = vmatpush1.msra.mxu0 %v302
    %377 = vmatprep.subr.mxu0 %v305
    %378 = vmatpush1.msra.mxu0 %v304
    %379 = vmatprep.subr.mxu0 %v307
    %380 = vmatpush1.msra.mxu0 %v306
    %381 = vmatprep.subr.mxu0 %v309
    %382 = vmatpush1.msra.mxu0 %v308
    %383 = vmatprep.subr.mxu0 %v311
    %384 = vmatpush1.msra.mxu0 %v310
    %385 = vmatprep.subr.mxu0 %v313
    %386 = vmatpush1.msra.mxu0 %v312
    %387 = vmatprep.subr.mxu0 %v315
    %388 = vmatpush1.msra.mxu0 %v314
    %389 = vmatprep.subr.mxu0 %v317
    %390 = vmatpush1.msra.mxu0 %v316
    %391 = vmatprep.subr.mxu0 %v319
    %392 = vmatpush1.msra.mxu0 %v318
    %393 = vmatprep.subr.mxu0 %v321
    %394 = vmatpush1.msra.mxu0 %v320
    %395 = vmatprep.subr.mxu0 %v323
    %396 = vmatpush1.msra.mxu0 %v322
    %397 = vmatprep.subr.mxu0 %v325
    %398 = vmatpush1.msra.mxu0 %v324
    %399 = vmatprep.subr.mxu0 %v327
    %400 = vmatpush1.msra.mxu0 %v326
    %401 = vmatprep.subr.mxu0 %v329
    %402 = vmatpush1.msra.mxu0 %v328
    %403 = vmatprep.subr.mxu0 %v331
    %404 = vmatpush1.msra.mxu0 %v330
    %405 = vmatprep.subr.mxu0 %v333
    %406 = vmatpush1.msra.mxu0 %v332
    %407 = vmatprep.subr.mxu0 %v335
    %408 = vmatpush1.msra.mxu0 %v334
    %409 = vmatprep.subr.mxu0 %v337
    %410 = vmatpush1.msra.mxu0 %v336
    %411 = vmatprep.subr.mxu0 0.0
    %412 = vmatpush1.msra.mxu0 0.0
    %413 = vmatprep.subr.mxu0 0.0
    %414 = vmatpush1.msra.mxu0 0.0
    %415 = vmatprep.subr.mxu0 0.0
    %416 = vmatpush1.msra.mxu0 0.0
    %417 = vmatprep.subr.mxu0 0.0
    %418 = vmatpush1.msra.mxu0 0.0
    %419 = vmatprep.mubr.f32.mxu0 %v353
    %420 = vmatmul.mubr.f32.gmra.mrb[0].mxu0 %v280
    %v421 = vpop.f32.mrb[0].mxu0
    %v422 = vadd.f32 %v344, %v421
    %v423 = vpop.f32.mrb[0].mxu0
    %v424 = vadd.f32 %v348, %v423
    %425 = vdwg.mxu0
    %v426 = vmax.f32 %v422, 0.0
    %v427 = vmax.f32 %v424, 0.0
    %v428 = vld [vmem:[%s4] sm:$0xff]
    %v429 = vld [vmem:[%s4 + $0x8] sm:$0xff]
    %v430 = vld [vmem:[%s4 + $0x10] sm:$0xff]
    %v431 = vld [vmem:[%s4 + $0x18] sm:$0xff]
    %v432 = vld [vmem:[%s4 + $0x20] sm:$0xff]
    %v433 = vld [vmem:[%s4 + $0x28] sm:$0xff]
    %v434 = vld [vmem:[%s4 + $0x30] sm:$0xff]
    %v435 = vld [vmem:[%s4 + $0x38] sm:$0xff]
    %v436 = vld [vmem:[%s4 + $0x40] sm:$0xff]
    %v437 = vld [vmem:[%s4 + $0x48] sm:$0xff]
    %v438 = vld [vmem:[%s4 + $0x50] sm:$0xff]
    %v439 = vld [vmem:[%s4 + $0x58] sm:$0xff]
    %v440 = vld [vmem:[%s4 + $0x60] sm:$0xff]
    %v441 = vld [vmem:[%s4 + $0x68] sm:$0xff]
    %v442 = vld [vmem:[%s4 + $0x70] sm:$0xff]
    %v443 = vld [vmem:[%s4 + $0x78] sm:$0xff]
    %v444 = vld [vmem:[%s4 + $0x80] sm:$0xff]
    %v445 = vld [vmem:[%s4 + $0x88] sm:$0xff]
    %v446 = vld [vmem:[%s4 + $0x90] sm:$0xff]
    %v447 = vld [vmem:[%s4 + $0x98] sm:$0xff]
    %v448 = vld [vmem:[%s1] sm:$0xff]
    %v449 = vld [vmem:[%s5] sm:$0xff]
    %vm450 = vcmask 64512
    %v452 = vsel %vm450, %v448, 0
    %454 = vmatprep.subr.mxu0 0.0
    %455 = vmatpush1.msra.mxu0 %v449
    %456 = vmatprep.subr.mxu0 0.0
    %457 = vmatpush1.msra.mxu0 0.0
    %458 = vmatprep.subr.mxu0 0.0
    %459 = vmatpush1.msra.mxu0 0.0
    %460 = vmatprep.subr.mxu0 0.0
    %461 = vmatpush1.msra.mxu0 0.0
    %462 = vmatprep.subr.mxu0 0.0
    %463 = vmatpush1.msra.mxu0 0.0
    %464 = vmatprep.subr.mxu0 0.0
    %465 = vmatpush1.msra.mxu0 0.0
    %466 = vmatprep.subr.mxu0 0.0
    %467 = vmatpush1.msra.mxu0 0.0
    %468 = vmatprep.subr.mxu0 0.0
    %469 = vmatpush1.msra.mxu0 0.0
    %470 = vmatprep.subr.mxu0 0.0
    %471 = vmatpush1.msra.mxu0 0.0
    %472 = vmatprep.subr.mxu0 0.0
    %473 = vmatpush1.msra.mxu0 0.0
    %474 = vmatprep.subr.mxu0 0.0
    %475 = vmatpush1.msra.mxu0 0.0
    %476 = vmatprep.subr.mxu0 0.0
    %477 = vmatpush1.msra.mxu0 0.0
    %478 = vmatprep.subr.mxu0 0.0
    %479 = vmatpush1.msra.mxu0 0.0
    %480 = vmatprep.subr.mxu0 0.0
    %481 = vmatpush1.msra.mxu0 0.0
    %482 = vmatprep.subr.mxu0 0.0
    %483 = vmatpush1.msra.mxu0 0.0
    %484 = vmatprep.subr.mxu0 0.0
    %485 = vmatpush1.msra.mxu0 0.0
    %486 = vmatprep.subr.mxu0 0.0
    %487 = vmatpush1.msra.mxu0 0.0
    %488 = vmatprep.subr.mxu0 0.0
    %489 = vmatpush1.msra.mxu0 0.0
    %490 = vmatprep.subr.mxu0 0.0
    %491 = vmatpush1.msra.mxu0 0.0
    %492 = vmatprep.subr.mxu0 0.0
    %493 = vmatpush1.msra.mxu0 0.0
    %494 = vmatprep.subr.mxu0 0.0
    %495 = vmatpush1.msra.mxu0 0.0
    %496 = vmatprep.subr.mxu0 0.0
    %497 = vmatpush1.msra.mxu0 0.0
    %498 = vmatprep.subr.mxu0 0.0
    %499 = vmatpush1.msra.mxu0 0.0
    %500 = vmatprep.subr.mxu0 0.0
    %501 = vmatpush1.msra.mxu0 0.0
    %502 = vmatprep.subr.mxu0 0.0
    %503 = vmatpush1.msra.mxu0 0.0
    %504 = vmatprep.subr.mxu0 0.0
    %505 = vmatpush1.msra.mxu0 0.0
    %506 = vmatprep.subr.mxu0 0.0
    %507 = vmatpush1.msra.mxu0 0.0
    %508 = vmatprep.subr.mxu0 0.0
    %509 = vmatpush1.msra.mxu0 0.0
    %510 = vmatprep.subr.mxu0 0.0
    %511 = vmatpush1.msra.mxu0 0.0
    %512 = vmatprep.subr.mxu0 0.0
    %513 = vmatpush1.msra.mxu0 0.0
    %514 = vmatprep.subr.mxu0 0.0
    %515 = vmatpush1.msra.mxu0 0.0
    %516 = vmatprep.subr.mxu0 0.0
    %517 = vmatpush1.msra.mxu0 0.0
    %518 = vmatprep.mubr.f32.mxu0 0.0
    %519 = vmatmul.mubr.f32.gmra.mrb[0].mxu0 %v452
    %v520 = vpop.f32.mrb[0].mxu0
    %v521 = vadd.f32 0.0, %v520
    %v522 = vpop.f32.mrb[0].mxu0
    %523 = vdwg.mxu0
    %vm524 = vcmask 261120
    %v526 = vsel %vm524, %v427, 0
    %528 = vmatprep.subr.mxu0 0.0
    %529 = vmatpush1.msra.mxu0 %v428
    %530 = vmatprep.subr.mxu0 0.0
    %531 = vmatpush1.msra.mxu0 %v429
    %532 = vmatprep.subr.mxu0 0.0
    %533 = vmatpush1.msra.mxu0 %v430
    %534 = vmatprep.subr.mxu0 0.0
    %535 = vmatpush1.msra.mxu0 %v431
    %536 = vmatprep.subr.mxu0 0.0
    %537 = vmatpush1.msra.mxu0 %v432
    %538 = vmatprep.subr.mxu0 0.0
    %539 = vmatpush1.msra.mxu0 %v433
    %540 = vmatprep.subr.mxu0 0.0
    %541 = vmatpush1.msra.mxu0 %v434
    %542 = vmatprep.subr.mxu0 0.0
    %543 = vmatpush1.msra.mxu0 %v435
    %544 = vmatprep.subr.mxu0 0.0
    %545 = vmatpush1.msra.mxu0 %v436
    %546 = vmatprep.subr.mxu0 0.0
    %547 = vmatpush1.msra.mxu0 %v437
    %548 = vmatprep.subr.mxu0 0.0
    %549 = vmatpush1.msra.mxu0 %v438
    %550 = vmatprep.subr.mxu0 0.0
    %551 = vmatpush1.msra.mxu0 %v439
    %552 = vmatprep.subr.mxu0 0.0
    %553 = vmatpush1.msra.mxu0 %v440
    %554 = vmatprep.subr.mxu0 0.0
    %555 = vmatpush1.msra.mxu0 %v441
    %556 = vmatprep.subr.mxu0 0.0
    %557 = vmatpush1.msra.mxu0 %v442
    %558 = vmatprep.subr.mxu0 0.0
    %559 = vmatpush1.msra.mxu0 %v443
    %560 = vmatprep.subr.mxu0 0.0
    %561 = vmatpush1.msra.mxu0 %v444
    %562 = vmatprep.subr.mxu0 0.0
    %563 = vmatpush1.msra.mxu0 %v445
    %564 = vmatprep.subr.mxu0 0.0
    %565 = vmatpush1.msra.mxu0 %v446
    %566 = vmatprep.subr.mxu0 0.0
    %567 = vmatpush1.msra.mxu0 %v447
    %568 = vmatprep.subr.mxu0 0.0
    %569 = vmatpush1.msra.mxu0 0.0
    %570 = vmatprep.subr.mxu0 0.0
    %571 = vmatpush1.msra.mxu0 0.0
    %572 = vmatprep.subr.mxu0 0.0
    %573 = vmatpush1.msra.mxu0 0.0
    %574 = vmatprep.subr.mxu0 0.0
    %575 = vmatpush1.msra.mxu0 0.0
    %576 = vmatprep.subr.mxu0 0.0
    %577 = vmatpush1.msra.mxu0 0.0
    %578 = vmatprep.subr.mxu0 0.0
    %579 = vmatpush1.msra.mxu0 0.0
    %580 = vmatprep.subr.mxu0 0.0
    %581 = vmatpush1.msra.mxu0 0.0
    %582 = vmatprep.subr.mxu0 0.0
    %583 = vmatpush1.msra.mxu0 0.0
    %584 = vmatprep.subr.mxu0 0.0
    %585 = vmatpush1.msra.mxu0 0.0
    %586 = vmatprep.subr.mxu0 0.0
    %587 = vmatpush1.msra.mxu0 0.0
    %588 = vmatprep.subr.mxu0 0.0
    %589 = vmatpush1.msra.mxu0 0.0
    %590 = vmatprep.subr.mxu0 0.0
    %591 = vmatpush1.msra.mxu0 0.0
    %592 = vmatprep.mubr.f32.mxu0 %v526
    %593 = vmatmul.mubr.f32.gmra.mrb[0].mxu0 %v426
    %v594 = vpop.f32.mrb[0].mxu0
    %v595 = vadd.f32 %v521, %v594
    %v596 = vpop.f32.mrb[0].mxu0
    %597 = vdwg.mxu0
    %v598 = vld [vmem:[%s6 + $0x2] sm:$0x1]
    %v599 = vlaneseq
    %v600 = vshrl.u32 %v599, 7
    %v601 = vsub.s32 0, %v600
    %v602 = vrot.slane %v598, %v601
    %v603 = vadd.f32 %v595, %v602
    %604 = vmax.xlane.f32.xlu0 %v603
    %v605 = vpop.xlane.xlu0 %604
    %v606 = vsub.f32 %v603, %v605
    %v607 = vmul.f32 %v606, 1.442695
    %v608 = vpow.pop %v607
    %609 = vadd.xlane.f32.xlu0 %v608
    %v610 = vpop.xlane.xlu0 %609
    %v611 = vrcp.pop %v610
    %v612 = vmul.f32 %v610, %v611
    %v613 = vsub.f32 2.0, %v612
    %v614 = vmul.f32 %v611, %v613
    %v615 = vmul.f32 %v608, %v614
    %616 = vst [vmem:[#allocation2] sm:$0xff] %v615
    // Predicated region
    $region30: #{tpu_custom_call.1} parent=1 // pred_check
      _
    $region31: #{tpu_custom_call.1} parent=1 // pred_check_branch
      %618 = sbr.rel (0) target = $region33
    $region32: #{tpu_custom_call.1} parent=1 // pred_region
      %s620 = ssub.s32 128, 128
      %621 = vsyncadd [#allocation3], %s620
      %s623 = sshll.u32 [#allocation2], 4
      %s624 = int_to_ptr.vmem [resolvable:$true] %s623
      %626 = dma.vmem_to_hbm [thread:$0]  %s624, 128, %s7, [#allocation3]
    $region33: #{tpu_custom_call.1} parent=1 // pred_fallthru
      _
    // Predicated region
    $region34: #{tpu_custom_call.1} parent=1 // pred_check
      _
    $region35: #{tpu_custom_call.1} parent=1 // pred_check_branch
      %628 = sbr.rel (0) target = $region37
    $region36: #{tpu_custom_call.1} parent=1 // pred_region
      %629 = dma.done [#allocation3], 128
    $region37: #{tpu_custom_call.1} parent=1 // pred_fallthru
      _
    %630 = vsyncpa [#allocation3], 1

</llo_original>
